<compile_context>
chip_gen: v6e
topology: v6e:2x2x1
jax: 0.10.0
libtpu: 0.0.40
codegen_flags: <defaults>
</compile_context>

<pallas_src>
import functools

import jax
import jax.numpy as jnp
from jax.experimental import pallas as pl
from jax.experimental.pallas import tpu as pltpu


def _patch_embed_kernel(x_ref, w_ref, b_ref, o_ref):
    # x_ref: (tm, Kp)  patch features for this row tile (bf16 or f32)
    # w_ref: (Kp, Ep)  projection weight, K-major (E padded to Ep)
    # b_ref: (1, Ep)   f32 bias (padded)
    # o_ref: (tm, Ep)  output embeddings, already in the FINAL dtype
    acc = jnp.dot(x_ref[...], w_ref[...], preferred_element_type=jnp.float32)
    o_ref[...] = (acc + b_ref[...]).astype(o_ref.dtype)


def _probe_copy_kernel(x_ref, o_ref):
    o_ref[...] = x_ref[...]


@functools.lru_cache(maxsize=None)
def _single_buffer_supported():
    """Does this Pallas/Mosaic accept pipeline_mode=pl.Buffered(1) on a
    grid-invariant input BlockSpec?  Used to single-buffer the resident
    weight/bias (saves K*Ep*2 bytes of VMEM, matters on v7x's 64 MiB)."""
    try:
        inv_spec = pl.BlockSpec((8, 128), lambda i: (0, 0),
                                pipeline_mode=pl.Buffered(1))
        fn = pl.pallas_call(
            _probe_copy_kernel,
            out_shape=jax.ShapeDtypeStruct((16, 128), jnp.float32),
            grid=(2,),
            in_specs=[inv_spec],
            out_specs=pl.BlockSpec((8, 128), lambda i: (i, 0)),
        )
        jax.jit(fn).lower(jnp.zeros((8, 128), jnp.float32)).compile()
        return True
    except Exception:
        return False


def _vmem_capacity_bytes():
    try:
        cap = getattr(pltpu.get_tpu_info(), "vmem_capacity_bytes", None)
        if cap:
            return int(cap)
    except Exception:
        pass
    return 64 << 20  # conservative fallback (v7x per-TensorCore VMEM)


def _round_up(v, m):
    return ((v + m - 1) // m) * m


def _rearrange_patches(x, patch_size):
    # 'b c (h s1) (w s2) -> b (h w) (s1 s2 c)'
    B, C, H, W = x.shape
    s1 = s2 = patch_size
    h, w = H // s1, W // s2
    x = x.reshape(B, C, h, s1, w, s2)
    x = jnp.transpose(x, (0, 2, 4, 3, 5, 1))      # b h w s1 s2 c
    return x.reshape(B, h * w, s1 * s2 * C)


def _vmem_estimate(tm, Kp, Ep, in_bytes, out_bytes, weight_bufs):
    return (2 * tm * Kp * in_bytes              # x tile, double-buffered
            + weight_bufs * Kp * Ep * in_bytes  # resident weight
            + 2 * tm * Ep * out_bytes           # output tile, double-buffered
            + weight_bufs * Ep * 4)             # bias


def _pick_tm(M, Kp, Ep, in_bytes, out_bytes, weight_bufs, budget):
    """Largest lane/MXU-friendly row tile that fits the VMEM budget,
    preferring >= 4 evenly sized grid steps (v7x megacore balance)."""
    if M <= 8:
        return M  # block equals the full array dim -> (8,128) rule satisfied

    cands = (2048, 1024, 512, 256, 128, 64, 32, 16, 8)

    def fits(tm):
        return _vmem_estimate(tm, Kp, Ep, in_bytes, out_bytes,
                              weight_bufs) <= budget

    for tm in cands:  # even, >= 4-step splits: best cross-core balance
        if tm < M and M % tm == 0 and M // tm >= 4 and fits(tm):
            return tm
    for tm in cands:  # >= 4 steps, possibly ragged tail (masked by Pallas)
        if fits(tm) and pl.cdiv(M, tm) >= 4:
            return tm
    for tm in cands:  # >= 2 steps
        if fits(tm) and pl.cdiv(M, tm) >= 2:
            return tm
    return 8


@functools.partial(
    jax.jit,
    static_argnames=("patch_size", "tm", "vmem_limit", "single_buffer",
                     "use_bf16_operands"))
def _patch_embedding_impl(x, weight, bias, *, patch_size, tm, vmem_limit,
                          single_buffer, use_bf16_operands):
    B, C, H, W = x.shape
    E, K = weight.shape
    op_dtype = jnp.bfloat16 if use_bf16_operands else x.dtype
    out_dtype = x.dtype

    # Cast FIRST: if XLA materializes the transpose, it moves narrow bytes.
    patches = _rearrange_patches(x.astype(op_dtype), patch_size)  # (B, N, K)
    N = patches.shape[1]
    M = B * N
    flat = patches.reshape(M, K)

    Kp = _round_up(K, 128)   # lane-dense x tile / fully-filled MXU contraction
    Ep = _round_up(E, 128)   # lane-dense output stores (no vst.msk)
    if Kp != K:
        flat = jnp.pad(flat, ((0, 0), (0, Kp - K)))
    w_t = weight.T.astype(op_dtype)                  # (K, E)
    if Kp != K or Ep != E:
        w_t = jnp.pad(w_t, ((0, Kp - K), (0, Ep - E)))
    b1 = bias.astype(jnp.float32)
    if Ep != E:
        b1 = jnp.pad(b1, (0, Ep - E))
    b2d = b1.reshape(1, Ep)

    grid = (pl.cdiv(M, tm),)  # ragged last row block handled by Pallas masking

    if single_buffer:
        # Grid-invariant operands: fetched once, no need to double-buffer.
        w_spec = pl.BlockSpec((Kp, Ep), lambda i: (0, 0),
                              pipeline_mode=pl.Buffered(1))
        b_spec = pl.BlockSpec((1, Ep), lambda i: (0, 0),
                              pipeline_mode=pl.Buffered(1))
    else:
        w_spec = pl.BlockSpec((Kp, Ep), lambda i: (0, 0))
        b_spec = pl.BlockSpec((1, Ep), lambda i: (0, 0))

    cost = pl.CostEstimate(
        flops=2 * M * Kp * Ep,
        transcendentals=0,
        bytes_accessed=(M * Kp * flat.dtype.itemsize
                        + Kp * Ep * w_t.dtype.itemsize
                        + Ep * 4
                        + M * Ep * jnp.dtype(out_dtype).itemsize),
    )

    out = pl.pallas_call(
        _patch_embed_kernel,
        out_shape=jax.ShapeDtypeStruct((M, Ep), out_dtype),
        grid_spec=pltpu.PrefetchScalarGridSpec(
            num_scalar_prefetch=0,
            grid=grid,
            in_specs=[
                pl.BlockSpec((tm, Kp), lambda i: (i, 0)),
                w_spec,
                b_spec,
            ],
            out_specs=pl.BlockSpec((tm, Ep), lambda i: (i, 0)),
        ),
        compiler_params=pltpu.CompilerParams(
            dimension_semantics=("parallel",),
            # Let XLA try to fuse the (already narrow-dtype) rearrange/pad
            # chain into the kernel's input DMA.
            allow_input_fusion=[True, False, False],
            vmem_limit_bytes=vmem_limit,
        ),
        cost_estimate=cost,
    )(flat, w_t, b2d)

    if Ep != E:
        out = out[:, :E]
    return out.reshape(B, N, E)   # already in the final dtype (x.dtype)


def patch_embedding(x, weight, bias, *, patch_size, use_bf16_operands=True):
    """x: (B, C, H, W); weight: (E, K); bias: (E,).  Returns (B, N, E), x.dtype."""
    B, C, H, W = x.shape
    E, K = weight.shape
    if K != patch_size * patch_size * C:
        raise ValueError("weight K dim must equal patch_size**2 * in_channels")
    M = B * (H // patch_size) * (W // patch_size)
    Kp = _round_up(K, 128)
    Ep = _round_up(E, 128)
    in_bytes = 2 if use_bf16_operands else jnp.dtype(x.dtype).itemsize
    out_bytes = jnp.dtype(x.dtype).itemsize

    single_buffer = _single_buffer_supported()
    weight_bufs = 1 if single_buffer else 2
    cap = _vmem_capacity_bytes()                      # per-generation VMEM
    budget = max(cap - (24 << 20), 16 << 20)          # leave compiler headroom
    tm = _pick_tm(M, Kp, Ep, in_bytes, out_bytes, weight_bufs, budget)
    vmem_est = _vmem_estimate(tm, Kp, Ep, in_bytes, out_bytes, weight_bufs)
    vmem_limit = int(min(max(vmem_est + (2 << 20), 32 << 20), cap))

    return _patch_embedding_impl(
        x, weight, bias, patch_size=patch_size, tm=tm, vmem_limit=vmem_limit,
        single_buffer=single_buffer, use_bf16_operands=use_bf16_operands)


def _reference(x, weight, bias, patch_size):
    patches = _rearrange_patches(x, patch_size)
    return jnp.einsum("bnk,ek->bne", patches, weight) + bias


if __name__ == "__main__":
    # Small config consistent with the module: in_channels=4, patch_size=4,
    # emb_size=32, 16x16 image -> 16 patches of dim 64 per image.
    B, C, H, W = 2, 4, 16, 16
    patch_size = 4
    emb_size = 32
    K = patch_size * patch_size * C

    key = jax.random.PRNGKey(0)
    kx, kw, kb = jax.random.split(key, 3)
    x = jax.random.normal(kx, (B, C, H, W), dtype=jnp.float32)
    # Deterministic synthetic parameters (nn.Linear(K, emb_size) shapes).
    weight = jax.random.normal(kw, (emb_size, K), dtype=jnp.float32) * 0.02
    bias = jax.random.normal(kb, (emb_size,), dtype=jnp.float32) * 0.01

    out = patch_embedding(x, weight, bias, patch_size=patch_size)
    out = jax.block_until_ready(out)

    ref = _reference(x, weight, bias, patch_size)
    n_patches = (H // patch_size) * (W // patch_size)
    assert out.shape == (B, n_patches, emb_size)
    assert out.dtype == x.dtype
    # bf16 GEMM operands with f32 accumulation -> loose elementwise tolerance.
    assert jnp.allclose(out, ref, atol=2e-2, rtol=2e-2), float(
        jnp.max(jnp.abs(out - ref)))

    print("KERNEL_OK")
</pallas_src>

<mosaic_0001>
module attributes {stable_mosaic.version = 11 : i64} {
  func.func @_patch_embed_kernel(%arg0: i32, %arg1: memref<8x128xbf16, #tpu.memory_space<vmem>>, %arg2: memref<128x128xbf16, #tpu.memory_space<vmem>>, %arg3: memref<1x128xf32, #tpu.memory_space<vmem>>, %arg4: memref<8x128xf32, #tpu.memory_space<vmem>>) attributes {dimension_semantics = [#tpu.dimension_semantics<parallel>], iteration_bounds = array<i64: 4>, scalar_prefetch = 0 : i64, scratch_operands = 0 : i64, tpu.core_type = #tpu.core_type<tc>, window_params = [{transform_indices = @transform_0, window_bounds = array<i64: 8, 128>}, {pipeline_mode = #tpu.pipeline_mode<synchronous>, transform_indices = @transform_1, window_bounds = array<i64: 128, 128>}, {pipeline_mode = #tpu.pipeline_mode<synchronous>, transform_indices = @transform_2, window_bounds = array<i64: 1, 128>}, {transform_indices = @transform_3, window_bounds = array<i64: 8, 128>}]} {
    %c0 = arith.constant 0 : index
    %c0_0 = arith.constant 0 : index
    %0 = vector.load %arg1[%c0, %c0_0] : memref<8x128xbf16, #tpu.memory_space<vmem>>, vector<8x128xbf16>
    %c0_1 = arith.constant 0 : index
    %c0_2 = arith.constant 0 : index
    %1 = vector.load %arg2[%c0_1, %c0_2] : memref<128x128xbf16, #tpu.memory_space<vmem>>, vector<128x128xbf16>
    %cst = arith.constant dense<0.000000e+00> : vector<8x128xf32>
    %2 = tpu.matmul %0, %1, %cst {dimension_numbers = #tpu.dot_dimension_numbers<[1], [0], [0], [1], [0, 0, 1, 1], [], []>} : vector<8x128xbf16>, vector<128x128xbf16>, vector<8x128xf32> -> vector<8x128xf32>
    %c0_3 = arith.constant 0 : index
    %c0_4 = arith.constant 0 : index
    %3 = vector.load %arg3[%c0_3, %c0_4] : memref<1x128xf32, #tpu.memory_space<vmem>>, vector<1x128xf32>
    %4 = vector.broadcast %3 : vector<1x128xf32> to vector<8x128xf32>
    %5 = arith.addf %2, %4 : vector<8x128xf32>
    %c0_5 = arith.constant 0 : index
    %c0_6 = arith.constant 0 : index
    %6 = vector.load %arg4[%c0_5, %c0_6] : memref<8x128xf32, #tpu.memory_space<vmem>>, vector<8x128xf32>
    tpu.vector_store %arg4[%c0_5, %c0_6], %5 {strides = array<i32>} : memref<8x128xf32, #tpu.memory_space<vmem>>, vector<8x128xf32>,
    return
  }
  func.func @transform_0(%arg0: i32) -> (i32, i32) {
    %c0_i32 = arith.constant 0 : i32
    %c0_i32_0 = arith.constant 0 : i32
    return %arg0, %c0_i32 : i32, i32
  }
  func.func @transform_1(%arg0: i32) -> (i32, i32) {
    %c0_i32 = arith.constant 0 : i32
    %c0_i32_0 = arith.constant 0 : i32
    %c0_i32_1 = arith.constant 0 : i32
    return %c0_i32, %c0_i32_0 : i32, i32
  }
  func.func @transform_2(%arg0: i32) -> (i32, i32) {
    %c0_i32 = arith.constant 0 : i32
    %c0_i32_0 = arith.constant 0 : i32
    %c0_i32_1 = arith.constant 0 : i32
    return %c0_i32, %c0_i32_0 : i32, i32
  }
  func.func @transform_3(%arg0: i32) -> (i32, i32) {
    %c0_i32 = arith.constant 0 : i32
    %c0_i32_0 = arith.constant 0 : i32
    return %arg0, %c0_i32 : i32, i32
  }
}

</mosaic_0001>

<llo_original>
// kernel: _patch_embedding_impl.2
$region0: #{_patch_embedding_impl.2}
  #allocation0 [shape = 'u32[]', space=smem, size = 0x4, offset = 0x4, fixed_abs, tag = 'smem constant byte address 0x4 - core index']
  #allocation1 [shape = 'u32[144,128]{1,0:T(1,128)}', space=vmem, size = 0x12000, scoped, tag = 'internal scratch']
  #allocation2 [shape = 'u32[2048]{0}', space=vmem, size = 0x2000, scoped, tag = 'scoped memory for _patch_embedding_impl.2']
  #allocation3 [shape = 'u32[2048]{0}', space=vmem, size = 0x2000, scoped, tag = 'scoped memory for _patch_embedding_impl.2']
  #allocation4 [shape = 'u32[2048]{0}', space=vmem, size = 0x2000, scoped, tag = 'scoped memory for _patch_embedding_impl.2']
  #allocation5 [shape = 'u32[2048]{0}', space=vmem, size = 0x2000, scoped, tag = 'scoped memory for _patch_embedding_impl.2']
  #allocation6 [shape = 'u32[2048]{0}', space=vmem, size = 0x2000, scoped, tag = 'scoped memory for _patch_embedding_impl.2']
  %s0 = inlined_call_operand.vmem [shape: bf16[128,128], index: 0, kind: input, shape index: {}]
  %s1 = inlined_call_operand.vmem [shape: f32[1,128], index: 1, kind: input, shape index: {}]
  %s2 = inlined_call_operand.vmem [shape: bf16[32,64], index: 2, kind: input, shape index: {}]
  %s3 = inlined_call_operand.<no memory space> [shape: bf16[], index: 3, kind: input, shape index: {}]
  %s4 = inlined_call_operand.hbm [shape: f32[32,128], index: 4, kind: output, shape index: {}]
  %s5 = sld [smem:[#allocation0]]
  $region45: #{_patch_embedding_impl.2} parent=0
    _
  %s7 = ssub.s32 1, %s5
  %s8 = scalar_select 0, %s7, %s5
  %v9 = vstv %s3
  %v10 = vunpack.i.l.bf16 %v9
  %v12 = vunpack.i.h.bf16 %v9
  $region1: #{_patch_embedding_impl.2} parent=0
    #allocation7 [shape = 'u8[8192]{0}', space=vmem, size = 0x2000, scoped, tag = 'output window, operand 0']
    #allocation8 [shape = 's32[2]{0}', space=sflag, size = 0x8, scoped, tag = 'scoped memory for _patch_embedding_impl.2']
    %14 = vsyncpa [#allocation8], 0
    %s15 = scalar_lea.sflag [#allocation8], 1
    %16 = vsyncpa %s15, 0
    loop: start=0, step=1, limit=6
    $region2: #{_patch_embedding_impl.2} parent=1 // loop_pre_header
      _
    $region3: #{_patch_embedding_impl.2} parent=1 // loop_header
      %s18 = sphi 0, %s22
      %p19 = scmp.ge.s32.totalorder %s18, 6
      %s28 = sphi 0, %s30
      %s31 = sphi 0, %s28
      %s32 = sphi 0, %s31
      %s48 = sphi 0, %s32
      %s52 = sphi 0, %s52
      %s54 = sphi 0, %s52
      %s55 = sphi 0, %s54
      %s69 = sphi 0, %s55
      %s73 = sphi 0, %s73
      %s75 = sphi 0, %s73
      %s76 = sphi 0, %s75
      %s90 = sphi 0, %s76
      %s96 = sphi 0, %s98
      %s99 = sphi 0, %s96
      %s100 = sphi 0, %s99
      %s116 = sphi 0, %s100
    $region4: #{_patch_embedding_impl.2} parent=1 // loop_header_branch
      %21 = sbr.rel (%p19) target = $region8
    $region5: #{_patch_embedding_impl.2} parent=1 // loop_body
      %s23 = ssub.s32 %s18, 1
      %s24 = ssub.s32 %s18, 2
      %s25 = sadd.s32 %s18, 1
      %s26 = ssub.s32 %s18, %s25
      %p27 = scmp.eq.s32.totalorder %s26, 0
      %s29 = sadd.s32 %s28, 1
      %s30 = scalar_select %p27, %s28, %s29
      %p33 = pneg %p27
      %p34 = scmp.eq.s32.totalorder %s18, 3
      %p35 = por %p33, %p34
      %p36 = scmp.ne.s32.totalorder %s28, %s31
      %p37 = scmp.eq.s32.totalorder %s18, 0
      %p38 = por %p36, %p37
      %p39 = scmp.ne.s32.totalorder %s28, %s31
      %p40 = scmp.eq.s32.totalorder %s23, 3
      %p41 = por %p39, %p40
      %p42 = scmp.ne.s32.totalorder %s31, %s32
      %p43 = scmp.eq.s32.totalorder %s23, 0
      %p44 = por %p42, %p43
      %p45 = scmp.ne.s32.totalorder %s31, %s32
      %p46 = scmp.eq.s32.totalorder %s24, 3
      %p47 = por %p45, %p46
      %p49 = scmp.ne.s32.totalorder %s32, %s48
      %p50 = scmp.eq.s32.totalorder %s24, 0
      %p51 = por %p49, %p50
      %s53 = sadd.s32 %s52, 1
      %p56 = scmp.eq.s32.totalorder %s18, 3
      %p57 = scmp.ne.s32.totalorder %s52, %s54
      %p58 = scmp.eq.s32.totalorder %s18, 0
      %p59 = por %p57, %p58
      %p60 = scmp.ne.s32.totalorder %s52, %s54
      %p61 = scmp.eq.s32.totalorder %s23, 3
      %p62 = por %p60, %p61
      %p63 = scmp.ne.s32.totalorder %s54, %s55
      %p64 = scmp.eq.s32.totalorder %s23, 0
      %p65 = por %p63, %p64
      %p66 = scmp.ne.s32.totalorder %s54, %s55
      %p67 = scmp.eq.s32.totalorder %s24, 3
      %p68 = por %p66, %p67
      %p70 = scmp.ne.s32.totalorder %s55, %s69
      %p71 = scmp.eq.s32.totalorder %s24, 0
      %p72 = por %p70, %p71
      %s74 = sadd.s32 %s73, 1
      %p77 = scmp.eq.s32.totalorder %s18, 3
      %p78 = scmp.ne.s32.totalorder %s73, %s75
      %p79 = scmp.eq.s32.totalorder %s18, 0
      %p80 = por %p78, %p79
      %p81 = scmp.ne.s32.totalorder %s73, %s75
      %p82 = scmp.eq.s32.totalorder %s23, 3
      %p83 = por %p81, %p82
      %p84 = scmp.ne.s32.totalorder %s75, %s76
      %p85 = scmp.eq.s32.totalorder %s23, 0
      %p86 = por %p84, %p85
      %p87 = scmp.ne.s32.totalorder %s75, %s76
      %p88 = scmp.eq.s32.totalorder %s24, 3
      %p89 = por %p87, %p88
      %p91 = scmp.ne.s32.totalorder %s76, %s90
      %p92 = scmp.eq.s32.totalorder %s24, 0
      %p93 = por %p91, %p92
      %s94 = ssub.s32 %s18, %s25
      %p95 = scmp.eq.s32.totalorder %s94, 0
      %s97 = sadd.s32 %s96, 1
      %s98 = scalar_select %p95, %s96, %s97
      %p101 = pneg %p95
      %p102 = scmp.eq.s32.totalorder %s18, 3
      %p103 = por %p101, %p102
      %p104 = scmp.ne.s32.totalorder %s96, %s99
      %p105 = scmp.eq.s32.totalorder %s18, 0
      %p106 = por %p104, %p105
      %p107 = scmp.ne.s32.totalorder %s96, %s99
      %p108 = scmp.eq.s32.totalorder %s23, 3
      %p109 = por %p107, %p108
      %p110 = scmp.ne.s32.totalorder %s99, %s100
      %p111 = scmp.eq.s32.totalorder %s23, 0
      %p112 = por %p110, %p111
      %p113 = scmp.ne.s32.totalorder %s99, %s100
      %p114 = scmp.eq.s32.totalorder %s24, 3
      %p115 = por %p113, %p114
      %p117 = scmp.ne.s32.totalorder %s100, %s116
      %p118 = scmp.eq.s32.totalorder %s24, 0
      %p119 = por %p117, %p118
      %p120 = scmp.le.s32.totalorder 1, %s18
      %p121 = scmp.lt.s32.totalorder %s18, 5
      %p122 = pnand %p120, %p121
      %p123 = pneg %p122
      // Predicated region
      $region9: #{_patch_embedding_impl.2} parent=5 // pred_check
        _
      $region10: #{_patch_embedding_impl.2} parent=5 // pred_check_branch
        %125 = sbr.rel (%p122) target = $region12
      $region11: #{_patch_embedding_impl.2} parent=5 // pred_region
        %s126 = ssub.s32 %s18, 1
        // Predicated region
        $region13: #{_patch_embedding_impl.2} parent=11 // pred_check
          %p127 = pneg %p65
        $region14: #{_patch_embedding_impl.2} parent=11 // pred_check_branch
          %129 = sbr.rel (%p127) target = $region16
        $region15: #{_patch_embedding_impl.2} parent=11 // pred_region
          _
        $region16: #{_patch_embedding_impl.2} parent=11 // pred_fallthru
          _
        // Predicated region
        $region17: #{_patch_embedding_impl.2} parent=11 // pred_check
          %p130 = pneg %p86
        $region18: #{_patch_embedding_impl.2} parent=11 // pred_check_branch
          %132 = sbr.rel (%p130) target = $region20
        $region19: #{_patch_embedding_impl.2} parent=11 // pred_region
          _
        $region20: #{_patch_embedding_impl.2} parent=11 // pred_fallthru
          _
      $region12: #{_patch_embedding_impl.2} parent=5 // pred_fallthru
        _
      %p133 = scmp.lt.s32.totalorder %s18, 4
      // Predicated region
      $region21: #{_patch_embedding_impl.2} parent=5 // pred_check
        %p134 = pneg %p133
      $region22: #{_patch_embedding_impl.2} parent=5 // pred_check_branch
        %136 = sbr.rel (%p134) target = $region24
      $region23: #{_patch_embedding_impl.2} parent=5 // pred_region
        // Predicated region
        $region25: #{_patch_embedding_impl.2} parent=23 // pred_check
          %p137 = pneg %p38
        $region26: #{_patch_embedding_impl.2} parent=23 // pred_check_branch
          %139 = sbr.rel (%p137) target = $region28
        $region27: #{_patch_embedding_impl.2} parent=23 // pred_region
          %p140 = scmp.lt.s32.totalorder %s18, 3
          %s141 = scalar_select %p140, %s18, 3
          %s142 = smul.addr %s141, 4
          %s143 = scalar_lea.vmem %s2, %s142
        $region28: #{_patch_embedding_impl.2} parent=23 // pred_fallthru
          _
      $region24: #{_patch_embedding_impl.2} parent=5 // pred_fallthru
        _
      %p144 = scmp.le.s32.totalorder 1, %s18
      %p145 = scmp.lt.s32.totalorder %s18, 5
      %p146 = pnand %p144, %p145
      %p147 = pneg %p146
      // Predicated region
      $region29: #{_patch_embedding_impl.2} parent=5 // pred_check
        _
      $region30: #{_patch_embedding_impl.2} parent=5 // pred_check_branch
        %149 = sbr.rel (%p146) target = $region32
      $region31: #{_patch_embedding_impl.2} parent=5 // pred_region
        #allocation9 [shape = 'u8[2048]{0}', space=vmem, size = 0x800, dematerialized = true, scoped, tag = 'FusionAdapter Buffer %fusion.1 = bf16[32,128]{1,0:T(8,128)(2,1)} fusion(%param_2.1, %param_3), kind=kLoop, calls=%fused_computation.1.clone, metadata={op_name="jit(_patch_embedding_impl)/jit(_pad)/pad" stack_frame_id=12}']
        %s150 = ssub.s32 %s18, 1
        %p151 = scmp.lt.s32.totalorder %s23, 3
        %s152 = scalar_select %p151, %s23, 3
        %s153 = smul.addr %s152, 4
        %s154 = scalar_lea.vmem %s2, %s153
        %p155 = pneg %p44
        %p156 = pneg %p41
        %p157 = pneg %p65
        %p158 = pneg %p62
        %p159 = pneg %p86
        %p160 = pneg %p83
        %p161 = pneg %p112
        %p162 = pneg %p109
        %s163 = sand.u32 %s99, 1
        %s164 = scalar_lea.sflag [#allocation8], %s163
        %s165 = sand.u32 %s99, 1
        %s166 = smul.addr %s165, 8
        %s167 = scalar_lea.vmem [#allocation7], %s166
        %p168 = scmp.lt.s32.totalorder %s23, 3
        %s169 = scalar_select %p168, %s23, 3
        %s170 = smul.addr %s169, 4
        %s171 = scalar_lea.vmem %s2, %s170
        %s173 = sor.u32 255, 127
        %s174 = sand.u32 %s173, 85
        %s175 = sshrl.u32 %s174, 1
        %s176 = sor.u32 %s174, %s175
        %s177 = sand.u32 51, %s176
        %s178 = sshrl.u32 %s177, 2
        %s179 = sor.u32 %s177, %s178
        %s180 = sand.u32 15, %s179
        %v181 = vld [vmem:[%s171] sm:%s180]
        %v182 = vunpack.c.l.bf16 %v181
        %v183 = vunpack.c.h.bf16 %v181
        %v184 = vlaneseq
        %v185 = vand.u32 %v184, 127
        %vm187 = vcmp.lt.s32.totalorder %v185, 64
        %v188 = vsel %vm187, %v182, %v10
        %v189 = vpack.c.bf16 0.0, %v188
        %s191 = ssub.s32 16, 1
        %192 = vst [vmem:[#allocation9] sm:%s191] %v189
        %v194 = vld [vmem:[#allocation9] sm:$0xf]
        %v195 = vld [vmem:[%s0] sm:$0xf]
        %v196 = vld [vmem:[%s0 + $0x4] sm:$0xf]
        %v197 = vld [vmem:[%s0 + $0x8] sm:$0xf]
        %v198 = vld [vmem:[%s0 + $0xc] sm:$0xf]
        %v199 = vld [vmem:[%s0 + $0x10] sm:$0xf]
        %v200 = vld [vmem:[%s0 + $0x14] sm:$0xf]
        %v201 = vld [vmem:[%s0 + $0x18] sm:$0xf]
        %v202 = vld [vmem:[%s0 + $0x1c] sm:$0xf]
        %v203 = vld [vmem:[%s0 + $0x20] sm:$0xf]
        %v204 = vld [vmem:[%s0 + $0x24] sm:$0xf]
        %v205 = vld [vmem:[%s0 + $0x28] sm:$0xf]
        %v206 = vld [vmem:[%s0 + $0x2c] sm:$0xf]
        %v207 = vld [vmem:[%s0 + $0x30] sm:$0xf]
        %v208 = vld [vmem:[%s0 + $0x34] sm:$0xf]
        %v209 = vld [vmem:[%s0 + $0x38] sm:$0xf]
        %v210 = vld [vmem:[%s0 + $0x3c] sm:$0xf]
        %v211 = vld [vmem:[%s1] sm:$0x1]
        %v213 = vlaneseq
        %v214 = vshrl.u32 %v213, 7
        %v215 = vsub.s32 0, %v214
        %v216 = vrot.slane %v211, %v215
        %v234 = vunpack.c.l.b16 %v195
        %v235 = vunpack.c.l.b16 %v196
        %v236 = vunpack.c.l.b16 %v197
        %v237 = vunpack.c.l.b16 %v198
        %v238 = vunpack.c.l.b16 %v199
        %v239 = vunpack.c.l.b16 %v200
        %v240 = vunpack.c.l.b16 %v201
        %v241 = vunpack.c.l.b16 %v202
        %v242 = vunpack.c.l.b16 %v203
        %v243 = vunpack.c.l.b16 %v204
        %v244 = vunpack.c.l.b16 %v205
        %v245 = vunpack.c.l.b16 %v206
        %v246 = vunpack.c.l.b16 %v207
        %v247 = vunpack.c.l.b16 %v208
        %v248 = vunpack.c.l.b16 %v209
        %v249 = vunpack.c.l.b16 %v210
        %v250 = vpack.c.b16 %v235, %v234
        %v251 = vpack.c.b16 %v237, %v236
        %v252 = vpack.c.b16 %v239, %v238
        %v253 = vpack.c.b16 %v241, %v240
        %v254 = vpack.c.b16 %v243, %v242
        %v255 = vpack.c.b16 %v245, %v244
        %v256 = vpack.c.b16 %v247, %v246
        %v257 = vpack.c.b16 %v249, %v248
        %266 = vmatprep.subr.bf16.mxu0 0
        %267 = vmatpush1.bf16.msra.mxu0 %v257
        %268 = vmatprep.subr.bf16.mxu0 0
        %269 = vmatpush1.bf16.msra.mxu0 %v256
        %270 = vmatprep.subr.bf16.mxu0 0
        %271 = vmatpush1.bf16.msra.mxu0 %v255
        %272 = vmatprep.subr.bf16.mxu0 0
        %273 = vmatpush1.bf16.msra.mxu0 %v254
        %274 = vmatprep.subr.bf16.mxu0 0
        %275 = vmatpush1.bf16.msra.mxu0 %v253
        %276 = vmatprep.subr.bf16.mxu0 0
        %277 = vmatpush1.bf16.msra.mxu0 %v252
        %278 = vmatprep.subr.bf16.mxu0 0
        %279 = vmatpush1.bf16.msra.mxu0 %v251
        %280 = vmatprep.subr.bf16.mxu0 0
        %281 = vmatpush1.bf16.msra.mxu0 %v250
        %282 = vmatprep.subr.bf16.mxu0 0
        %283 = vmatpush2.bf16.msra.mxu0 0
        %284 = vmatprep.subr.bf16.mxu0 0
        %285 = vmatpush2.bf16.msra.mxu0 0
        %286 = vmatprep.subr.bf16.mxu0 0
        %287 = vmatpush2.bf16.msra.mxu0 0
        %288 = vmatprep.subr.bf16.mxu0 0
        %289 = vmatpush2.bf16.msra.mxu0 0
        %290 = vmatprep.subr.bf16.mxu0 0
        %291 = vmatpush2.bf16.msra.mxu0 0
        %292 = vmatprep.subr.bf16.mxu0 0
        %293 = vmatpush2.bf16.msra.mxu0 0
        %294 = vmatprep.subr.bf16.mxu0 0
        %295 = vmatpush2.bf16.msra.mxu0 0
        %296 = vmatprep.subr.bf16.mxu0 0
        %297 = vmatpush2.bf16.msra.mxu0 0
        %298 = vmatprep.mubr.bf16.mxu0 0
        %299 = vmatmul.mubr.bf16.gmra.mxu0 %v194
        %v300 = vpop.f32.mrf.mxu0
        %v301 = vadd.f32 %v216, %v300
        %v302 = vpop.f32.mrf.mxu0
        %v303 = vpop.f32.mrf.mxu0
        %v304 = vpop.f32.mrf.mxu0
        %305 = vdwg.mxu0
        %306 = vst [vmem:[%s167] sm:$0xff] %v301
        %s307 = sand.u32 %s99, 1
        %s308 = scalar_lea.sflag [#allocation8], %s307
        %s309 = sand.u32 %s99, 1
        %s310 = smul.addr %s309, 8
        %s311 = scalar_lea.vmem [#allocation7], %s310
        // Predicated region
        $region33: #{_patch_embedding_impl.2} parent=31 // pred_check
          %p312 = pneg %p109
        $region34: #{_patch_embedding_impl.2} parent=31 // pred_check_branch
          %314 = sbr.rel (%p312) target = $region36
        $region35: #{_patch_embedding_impl.2} parent=31 // pred_region
          %s316 = ssub.s32 128, 128
          %317 = vsyncadd %s308, %s316
          %s318 = smul.addr %s23, 128
          %s319 = scalar_lea.hbm %s4, %s318
          %s321 = sshll.u32 %s311, 4
          %s322 = int_to_ptr.vmem [resolvable:$true] %s321
          %324 = dma.vmem_to_hbm [thread:$0]  %s322, 128, %s319, %s308
        $region36: #{_patch_embedding_impl.2} parent=31 // pred_fallthru
          _
      $region32: #{_patch_embedding_impl.2} parent=5 // pred_fallthru
        _
      %p325 = scmp.le.s32.totalorder 2, %s18
      // Predicated region
      $region37: #{_patch_embedding_impl.2} parent=5 // pred_check
        %p326 = pneg %p325
      $region38: #{_patch_embedding_impl.2} parent=5 // pred_check_branch
        %328 = sbr.rel (%p326) target = $region40
      $region39: #{_patch_embedding_impl.2} parent=5 // pred_region
        %s329 = ssub.s32 %s18, 2
        // Predicated region
        $region41: #{_patch_embedding_impl.2} parent=39 // pred_check
          %p330 = pneg %p115
        $region42: #{_patch_embedding_impl.2} parent=39 // pred_check_branch
          %332 = sbr.rel (%p330) target = $region44
        $region43: #{_patch_embedding_impl.2} parent=39 // pred_region
          %s333 = sand.u32 %s100, 1
          %s334 = scalar_lea.sflag [#allocation8], %s333
          %s335 = sand.u32 %s100, 1
          %s336 = smul.addr %s335, 8
          %s337 = scalar_lea.vmem [#allocation7], %s336
          %338 = dma.done %s334, 128
        $region44: #{_patch_embedding_impl.2} parent=39 // pred_fallthru
          _
      $region40: #{_patch_embedding_impl.2} parent=5 // pred_fallthru
        _
    $region6: #{_patch_embedding_impl.2} parent=1 // loop_footer
      %s22 = sadd.s32 1, %s18
    $region7: #{_patch_embedding_impl.2} parent=1 // loop_footer_branch
      %17 = sbr.rel target = $region3
    $region8: #{_patch_embedding_impl.2} parent=1 // loop_exit
      _
    %339 = vsyncpa [#allocation8], 1
    %s340 = scalar_lea.sflag [#allocation8], 1
    %341 = vsyncpa %s340, 1

</llo_original>
